<compile_context>
chip_gen: v5e
topology: v5e:2x2
jax: 0.10.0
libtpu: 0.0.40
codegen_flags: <defaults>
</compile_context>

<pallas_src>
import functools

import jax
import jax.numpy as jnp
from jax.experimental import pallas as pl
from jax.experimental.pallas import tpu as pltpu


# -----------------------------------------------------------------------------
# Pallas kernel
# -----------------------------------------------------------------------------
def mha_kernel(x_ref, cpam_ref, sam_max_ref, sam_avg_ref, wv_ref, out_ref,
               max_acc, sum_acc, *, num_heads, C, L, TL):
    """Grid = (batch blocks ["parallel"], L blocks ["arbitrary", reduction]).

    x_ref       : (TB, C, TL)  input block (f32 or bf16; upcast in-kernel)
    cpam_ref    : (H, C, C)    per-head CPAM band matrices (resident)
    sam_max_ref : (H, C, C)    per-head SAM band matrices, max-pool channel
    sam_avg_ref : (H, C, C)    per-head SAM band matrices, avg-pool channel
    wv_ref      : (H,)         softmax(weight_var), SMEM
    out_ref     : (TB, C)      fused output block
    max_acc     : (TB, C) f32  running max over L   (VMEM scratch)
    sum_acc     : (TB, C) f32  running sum over L   (VMEM scratch)
    """
    l = pl.program_id(1)
    n_l = pl.num_programs(1)

    # ---- init running stats at the first L block ---------------------------
    @pl.when(l == 0)
    def _init():
        max_acc[...] = jnp.full(max_acc.shape, -jnp.inf, jnp.float32)
        sum_acc[...] = jnp.zeros(sum_acc.shape, jnp.float32)

    # ---- the only (TB, C, TL)-sized work: one pass, both reductions --------
    x = x_ref[...].astype(jnp.float32)                 # single load of the block

    if L % TL != 0:
        # Mask the padded tail of the last L block (garbage lanes -> neutral).
        lane = jax.lax.broadcasted_iota(jnp.int32, x.shape, 2)
        valid = (lane + l * TL) < L
        x_max = jnp.where(valid, x, -jnp.inf)
        x_sum = jnp.where(valid, x, 0.0)
    else:
        x_max = x
        x_sum = x

    max_acc[...] = jnp.maximum(max_acc[...], jnp.max(x_max, axis=-1))
    sum_acc[...] = sum_acc[...] + jnp.sum(x_sum, axis=-1)

    # ---- head loop + writeback only after the last L block -----------------
    @pl.when(l == n_l - 1)
    def _finalize():
        max_cur = max_acc[...]                          # max_L(x0)
        avg_cur = sum_acc[...] * (1.0 / L)              # mean_L(x0), TRUE L
        # conv_h(max)+conv_h(avg) == conv_h(max+avg) (linear, shared weights);
        # torch uses the ORIGINAL pools for every head's CPAM.
        sum_pool = max_cur + avg_cur                    # (TB, C)

        acc = jnp.zeros(out_ref.shape, jnp.float32)
        for h in range(num_heads):                      # heads carry (TB,C) state only
            scale = jax.nn.sigmoid(
                jnp.dot(sum_pool, cpam_ref[h],
                        preferred_element_type=jnp.float32))        # (TB, C) > 0

            # Pooled stats of self_attn = scale * x_h: positive per-(b,c)
            # rescale commutes with max/mean over L.  Two K=C MXU pushes
            # summed — no (TB, 2C) concat materialized.
            sam = jax.nn.sigmoid(
                jnp.dot(scale * max_cur, sam_max_ref[h],
                        preferred_element_type=jnp.float32)
                + jnp.dot(scale * avg_cur, sam_avg_ref[h],
                          preferred_element_type=jnp.float32))      # (TB, C) > 0

            # x_{h+1} = x_h + self_attn*sam = x_h * (1 + scale*sam):
            # positive broadcast rescale -> pooled stats update multiplicatively.
            factor = 1.0 + scale * sam
            max_cur = factor * max_cur                  # = max_L(x_{h+1})
            avg_cur = factor * avg_cur                  # = mean_L(x_{h+1})

            acc = acc + wv_ref[h] * max_cur             # torch.max(x_{h+1}, dim=2)[0]

        out_ref[...] = acc.astype(out_ref.dtype)


# -----------------------------------------------------------------------------
# Glue: parameter construction + pallas_call wrapper
# -----------------------------------------------------------------------------
def _band_matrix_T(w, C):
    """Transposed banded-Toeplitz matrix of a 'same'-padded 1D conv over the
    channel axis.  w: (k,) taps.  (v @ Mt)[c] == sum_j w[j]*v_pad[c + j - (k-1)//2]."""
    k = w.shape[0]
    p = (k - 1) // 2
    c_in = jnp.arange(C)[:, None]
    c_out = jnp.arange(C)[None, :]
    idx = c_in - c_out + p
    valid = (idx >= 0) & (idx < k)
    return jnp.where(valid, w[jnp.clip(idx, 0, k - 1)], 0.0).astype(jnp.float32)


def make_mha_params(key, num_heads, C):
    """Deterministic synthetic parameters matching the torch module's shapes."""
    neigh_k = list(range(3, 21, 2))  # MHA.neigh_k
    keys = jax.random.split(key, 2 * num_heads)

    cpam_mats, sam_max_mats, sam_avg_mats = [], [], []
    for i in range(num_heads):
        k_i = neigh_k[i]
        # CPAM: nn.Conv1d(1, 1, k_i, bias=False) -> (k_i,) taps.
        w_cpam = 0.3 * jax.random.normal(keys[2 * i], (k_i,), jnp.float32)
        # SpatialAttention: nn.Conv1d(2, 1, 7, bias=False) -> (2, 7) taps.
        w_sam = 0.3 * jax.random.normal(keys[2 * i + 1], (2, 7), jnp.float32)
        cpam_mats.append(_band_matrix_T(w_cpam, C))
        sam_max_mats.append(_band_matrix_T(w_sam[0], C))   # channel 0 = max pool
        sam_avg_mats.append(_band_matrix_T(w_sam[1], C))   # channel 1 = avg pool

    weight_var = jnp.ones((num_heads,), jnp.float32)        # Parameter(torch.ones(H))
    wv_softmax = jax.nn.softmax(weight_var)                 # exp(w_i) / sum exp(w)

    return (jnp.stack(cpam_mats), jnp.stack(sam_max_mats),
            jnp.stack(sam_avg_mats), wv_softmax)


@functools.partial(jax.jit, static_argnames=("num_heads", "max_tl"))
def mha_forward(x, cpam_mats, sam_max_mats, sam_avg_mats, wv, *, num_heads,
                max_tl=512):
    B, C, L = x.shape
    H = num_heads

    # ---- batch tile: "parallel" axis.  >= 2 grid steps when B > 8 so both
    # v7x TensorCores get work; multiple of 8 for the (TB, C) output block.
    if B <= 8:
        TB = B                                   # full-B block (sublane rule via ==B)
    else:
        TB = min(128, max(8, (B // 2) // 8 * 8))

    # ---- L tile: "arbitrary" (reduction) axis, streamed.  TL is either the
    # full L or a multiple of 128 (lane rule); tail blocks are masked.
    TL = L if L <= max_tl else max_tl

    n_b = pl.cdiv(B, TB)
    n_l = pl.cdiv(L, TL)

    # ---- VMEM budget (double-buffered x block + resident matrices + output
    # + accumulators) -> scoped limit with headroom, re-derived per tile.
    itemsize = jnp.dtype(x.dtype).itemsize
    x_block_bytes = TB * C * TL * itemsize
    mats_bytes = 3 * H * C * C * 4
    out_block_bytes = TB * C * 4
    scratch_bytes = 2 * TB * C * 4
    needed = 2 * x_block_bytes + 2 * mats_bytes + 2 * out_block_bytes + scratch_bytes
    vmem_limit = int(min(max(2 * needed, 32 * 1024 * 1024), 64 * 1024 * 1024))

    cost = pl.CostEstimate(
        flops=int(2 * B * C * L + B * H * (6 * C * C + 12 * C)),
        transcendentals=int(2 * B * H * C),
        bytes_accessed=int(B * C * L * itemsize + mats_bytes + B * C * 4),
    )

    kern = functools.partial(mha_kernel, num_heads=H, C=C, L=L, TL=TL)

    return pl.pallas_call(
        kern,
        out_shape=jax.ShapeDtypeStruct((B, C), jnp.float32),
        grid=(n_b, n_l),
        in_specs=[
            pl.BlockSpec((TB, C, TL), lambda b, l: (b, 0, l)),     # x: streamed
            pl.BlockSpec((H, C, C), lambda b, l: (0, 0, 0)),       # CPAM mats (resident)
            pl.BlockSpec((H, C, C), lambda b, l: (0, 0, 0)),       # SAM max mats
            pl.BlockSpec((H, C, C), lambda b, l: (0, 0, 0)),       # SAM avg mats
            pl.BlockSpec(memory_space=pltpu.MemorySpace.SMEM),     # softmax(weight_var)
        ],
        out_specs=pl.BlockSpec((TB, C), lambda b, l: (b, 0)),      # resident over l
        scratch_shapes=[
            pltpu.VMEM((TB, C), jnp.float32),   # running max over L
            pltpu.VMEM((TB, C), jnp.float32),   # running sum over L
        ],
        compiler_params=pltpu.CompilerParams(
            dimension_semantics=("parallel", "arbitrary"),
            vmem_limit_bytes=vmem_limit),
        cost_estimate=cost,
    )(x, cpam_mats, sam_max_mats, sam_avg_mats, wv)


# -----------------------------------------------------------------------------
# Pure-JAX reference (literal mirror of the torch forward) for correctness
# -----------------------------------------------------------------------------
def mha_reference(x, cpam_mats, sam_max_mats, sam_avg_mats, wv, num_heads):
    maxp0 = x.max(-1)          # pooled ONCE before the head loop, as in torch
    avgp0 = x.mean(-1)
    acc = jnp.zeros(x.shape[:2], jnp.float32)
    for h in range(num_heads):
        scale = jax.nn.sigmoid(maxp0 @ cpam_mats[h] + avgp0 @ cpam_mats[h])
        sa = x * scale[:, :, None]
        sam = jax.nn.sigmoid(sa.max(-1) @ sam_max_mats[h]
                             + sa.mean(-1) @ sam_avg_mats[h])
        x = x + sa * sam[:, :, None]
        acc = acc + wv[h] * x.max(-1)
    return acc


if __name__ == "__main__":
    num_heads = 3
    # Small shapes; L=200 with max_tl=128 exercises the streamed-L grid axis
    # (2 reduction steps) AND the masked-tail path; B=4, C=16 keep it tiny.
    B, C, L = 4, 16, 200

    key = jax.random.PRNGKey(0)
    kx, kp = jax.random.split(key)
    x = jax.random.normal(kx, (B, C, L), jnp.float32)

    cpam_mats, sam_max_mats, sam_avg_mats, wv = make_mha_params(kp, num_heads, C)

    ref = mha_reference(x, cpam_mats, sam_max_mats, sam_avg_mats, wv, num_heads)

    # Streamed path: TL=128 < L, masked tail, accumulators across 2 L blocks.
    out_stream = mha_forward(x, cpam_mats, sam_max_mats, sam_avg_mats, wv,
                             num_heads=num_heads, max_tl=128)
    out_stream = jax.block_until_ready(out_stream)
    assert out_stream.shape == (B, C)
    err = jnp.max(jnp.abs(out_stream - ref))
    assert jnp.allclose(out_stream, ref, atol=1e-4, rtol=1e-4), \
        f"streamed path max abs err {err}"

    # Single-block path: TL = L (full).
    out_full = mha_forward(x, cpam_mats, sam_max_mats, sam_avg_mats, wv,
                           num_heads=num_heads, max_tl=512)
    out_full = jax.block_until_ready(out_full)
    err = jnp.max(jnp.abs(out_full - ref))
    assert jnp.allclose(out_full, ref, atol=1e-4, rtol=1e-4), \
        f"full-block path max abs err {err}"

    print("KERNEL_OK")
</pallas_src>

<mosaic_0001>
module attributes {stable_mosaic.version = 11 : i64} {
  func.func @mha_kernel(%arg0: i32, %arg1: i32, %arg2: memref<4x16x128xf32, #tpu.memory_space<vmem>>, %arg3: memref<3x16x16xf32, #tpu.memory_space<vmem>>, %arg4: memref<3x16x16xf32, #tpu.memory_space<vmem>>, %arg5: memref<3x16x16xf32, #tpu.memory_space<vmem>>, %arg6: memref<3xf32, #tpu.memory_space<smem>>, %arg7: memref<4x16xf32, #tpu.memory_space<vmem>>, %arg8: memref<4x16xf32, #tpu.memory_space<vmem>>, %arg9: memref<4x16xf32, #tpu.memory_space<vmem>>) attributes {dimension_semantics = [#tpu.dimension_semantics<parallel>, #tpu.dimension_semantics<arbitrary>], iteration_bounds = array<i64: 1, 2>, scalar_prefetch = 0 : i64, scratch_operands = 2 : i64, tpu.core_type = #tpu.core_type<tc>, window_params = [{transform_indices = @transform_0, window_bounds = array<i64: 4, 16, 128>}, {pipeline_mode = #tpu.pipeline_mode<synchronous>, transform_indices = @transform_1, window_bounds = array<i64: 3, 16, 16>}, {pipeline_mode = #tpu.pipeline_mode<synchronous>, transform_indices = @transform_2, window_bounds = array<i64: 3, 16, 16>}, {pipeline_mode = #tpu.pipeline_mode<synchronous>, transform_indices = @transform_3, window_bounds = array<i64: 3, 16, 16>}, {transform_indices = @transform_4, window_bounds = array<i64: 3>}, {transform_indices = @transform_5, window_bounds = array<i64: 4, 16>}]} {
    %c0_i32 = arith.constant 0 : i32
    %0 = arith.cmpi eq, %arg1, %c0_i32 : i32
    %1 = arith.extui %0 : i1 to i32
    %c0_i32_0 = arith.constant 0 : i32
    %2 = arith.cmpi ne, %1, %c0_i32_0 : i32
    scf.if %2 {
      %cst_15 = arith.constant 0xFF800000 : f32
      %25 = vector.broadcast %cst_15 : f32 to vector<4x16xf32>
      %c0_16 = arith.constant 0 : index
      %c0_17 = arith.constant 0 : index
      %26 = vector.load %arg8[%c0_16, %c0_17] : memref<4x16xf32, #tpu.memory_space<vmem>>, vector<4x16xf32>
      tpu.vector_store %arg8[%c0_16, %c0_17], %25 {strides = array<i32>} : memref<4x16xf32, #tpu.memory_space<vmem>>, vector<4x16xf32>,
      %cst_18 = arith.constant 0.000000e+00 : f32
      %27 = vector.broadcast %cst_18 : f32 to vector<4x16xf32>
      %c0_19 = arith.constant 0 : index
      %c0_20 = arith.constant 0 : index
      %28 = vector.load %arg9[%c0_19, %c0_20] : memref<4x16xf32, #tpu.memory_space<vmem>>, vector<4x16xf32>
      tpu.vector_store %arg9[%c0_19, %c0_20], %27 {strides = array<i32>} : memref<4x16xf32, #tpu.memory_space<vmem>>, vector<4x16xf32>,
    } else {
    }
    %c0 = arith.constant 0 : index
    %c0_1 = arith.constant 0 : index
    %c0_2 = arith.constant 0 : index
    %3 = vector.load %arg2[%c0, %c0_1, %c0_2] : memref<4x16x128xf32, #tpu.memory_space<vmem>>, vector<4x16x128xf32>
    %4 = tpu.iota {dimensions = array<i32: 2>} : vector<4x16x128xi32>
    %c128_i32 = arith.constant 128 : i32
    %5 = arith.muli %arg1, %c128_i32 : i32
    %6 = vector.broadcast %5 : i32 to vector<4x16x128xi32>
    %7 = arith.addi %4, %6 : vector<4x16x128xi32>
    %c200_i32 = arith.constant 200 : i32
    %8 = vector.broadcast %c200_i32 : i32 to vector<4x16x128xi32>
    %9 = arith.cmpi slt, %7, %8 : vector<4x16x128xi32>
    %cst = arith.constant 0xFF800000 : f32
    %10 = vector.broadcast %cst : f32 to vector<4x16x128xf32>
    %11 = arith.select %9, %3, %10 : vector<4x16x128xi1>, vector<4x16x128xf32>
    %cst_3 = arith.constant 0.000000e+00 : f32
    %12 = vector.broadcast %cst_3 : f32 to vector<4x16x128xf32>
    %13 = arith.select %9, %3, %12 : vector<4x16x128xi1>, vector<4x16x128xf32>
    %c0_4 = arith.constant 0 : index
    %c0_5 = arith.constant 0 : index
    %14 = vector.load %arg8[%c0_4, %c0_5] : memref<4x16xf32, #tpu.memory_space<vmem>>, vector<4x16xf32>
    %cst_6 = arith.constant dense<0xFF800000> : vector<4x16xf32>
    %15 = vector.multi_reduction <maximumf>, %11, %cst_6 [2] : vector<4x16x128xf32> to vector<4x16xf32>
    %16 = arith.maximumf %14, %15 : vector<4x16xf32>
    %c0_7 = arith.constant 0 : index
    %c0_8 = arith.constant 0 : index
    %17 = vector.load %arg8[%c0_7, %c0_8] : memref<4x16xf32, #tpu.memory_space<vmem>>, vector<4x16xf32>
    tpu.vector_store %arg8[%c0_7, %c0_8], %16 {strides = array<i32>} : memref<4x16xf32, #tpu.memory_space<vmem>>, vector<4x16xf32>,
    %c0_9 = arith.constant 0 : index
    %c0_10 = arith.constant 0 : index
    %18 = vector.load %arg9[%c0_9, %c0_10] : memref<4x16xf32, #tpu.memory_space<vmem>>, vector<4x16xf32>
    %cst_11 = arith.constant dense<0.000000e+00> : vector<4x16xf32>
    %19 = vector.multi_reduction <add>, %13, %cst_11 [2] : vector<4x16x128xf32> to vector<4x16xf32>
    %20 = arith.addf %18, %19 : vector<4x16xf32>
    %c0_12 = arith.constant 0 : index
    %c0_13 = arith.constant 0 : index
    %21 = vector.load %arg9[%c0_12, %c0_13] : memref<4x16xf32, #tpu.memory_space<vmem>>, vector<4x16xf32>
    tpu.vector_store %arg9[%c0_12, %c0_13], %20 {strides = array<i32>} : memref<4x16xf32, #tpu.memory_space<vmem>>, vector<4x16xf32>,
    %c1_i32 = arith.constant 1 : i32
    %22 = arith.cmpi eq, %arg1, %c1_i32 : i32
    %23 = arith.extui %22 : i1 to i32
    %c0_i32_14 = arith.constant 0 : i32
    %24 = arith.cmpi ne, %23, %c0_i32_14 : i32
    scf.if %24 {
      %c0_15 = arith.constant 0 : index
      %c0_16 = arith.constant 0 : index
      %25 = vector.load %arg8[%c0_15, %c0_16] : memref<4x16xf32, #tpu.memory_space<vmem>>, vector<4x16xf32>
      %c0_17 = arith.constant 0 : index
      %c0_18 = arith.constant 0 : index
      %26 = vector.load %arg9[%c0_17, %c0_18] : memref<4x16xf32, #tpu.memory_space<vmem>>, vector<4x16xf32>
      %cst_19 = arith.constant 5.000000e-03 : f32
      %27 = vector.broadcast %cst_19 : f32 to vector<4x16xf32>
      %28 = arith.mulf %26, %27 : vector<4x16xf32>
      %29 = arith.addf %25, %28 : vector<4x16xf32>
      %cst_20 = arith.constant 0.000000e+00 : f32
      %30 = vector.broadcast %cst_20 : f32 to vector<4x16xf32>
      %c0_21 = arith.constant 0 : index
      %c0_22 = arith.constant 0 : index
      %c0_23 = arith.constant 0 : index
      %31 = vector.load %arg3[%c0_21, %c0_22, %c0_23] : memref<3x16x16xf32, #tpu.memory_space<vmem>>, vector<1x16x16xf32>
      %32 = vector.shape_cast %31 : vector<1x16x16xf32> to vector<16x16xf32>
      %cst_24 = arith.constant dense<0.000000e+00> : vector<4x16xf32>
      %33 = tpu.matmul %29, %32, %cst_24 {dimension_numbers = #tpu.dot_dimension_numbers<[1], [0], [0], [1], [0, 0, 1, 1], [], []>} : vector<4x16xf32>, vector<16x16xf32>, vector<4x16xf32> -> vector<4x16xf32>
      %34 = arith.negf %33 : vector<4x16xf32>
      %35 = math.exp %34 : vector<4x16xf32>
      %cst_25 = arith.constant 1.000000e+00 : f32
      %36 = vector.broadcast %cst_25 : f32 to vector<4x16xf32>
      %37 = arith.addf %36, %35 : vector<4x16xf32>
      %38 = arith.divf %36, %37 : vector<4x16xf32>
      %39 = arith.mulf %38, %25 : vector<4x16xf32>
      %c0_26 = arith.constant 0 : index
      %c0_27 = arith.constant 0 : index
      %c0_28 = arith.constant 0 : index
      %40 = vector.load %arg4[%c0_26, %c0_27, %c0_28] : memref<3x16x16xf32, #tpu.memory_space<vmem>>, vector<1x16x16xf32>
      %41 = vector.shape_cast %40 : vector<1x16x16xf32> to vector<16x16xf32>
      %cst_29 = arith.constant dense<0.000000e+00> : vector<4x16xf32>
      %42 = tpu.matmul %39, %41, %cst_29 {dimension_numbers = #tpu.dot_dimension_numbers<[1], [0], [0], [1], [0, 0, 1, 1], [], []>} : vector<4x16xf32>, vector<16x16xf32>, vector<4x16xf32> -> vector<4x16xf32>
      %43 = arith.mulf %38, %28 : vector<4x16xf32>
      %c0_30 = arith.constant 0 : index
      %c0_31 = arith.constant 0 : index
      %c0_32 = arith.constant 0 : index
      %44 = vector.load %arg5[%c0_30, %c0_31, %c0_32] : memref<3x16x16xf32, #tpu.memory_space<vmem>>, vector<1x16x16xf32>
      %45 = vector.shape_cast %44 : vector<1x16x16xf32> to vector<16x16xf32>
      %cst_33 = arith.constant dense<0.000000e+00> : vector<4x16xf32>
      %46 = tpu.matmul %43, %45, %cst_33 {dimension_numbers = #tpu.dot_dimension_numbers<[1], [0], [0], [1], [0, 0, 1, 1], [], []>} : vector<4x16xf32>, vector<16x16xf32>, vector<4x16xf32> -> vector<4x16xf32>
      %47 = arith.addf %42, %46 : vector<4x16xf32>
      %48 = arith.negf %47 : vector<4x16xf32>
      %49 = math.exp %48 : vector<4x16xf32>
      %cst_34 = arith.constant 1.000000e+00 : f32
      %50 = vector.broadcast %cst_34 : f32 to vector<4x16xf32>
      %51 = arith.addf %50, %49 : vector<4x16xf32>
      %52 = arith.divf %50, %51 : vector<4x16xf32>
      %53 = arith.mulf %38, %52 : vector<4x16xf32>
      %cst_35 = arith.constant 1.000000e+00 : f32
      %54 = vector.broadcast %cst_35 : f32 to vector<4x16xf32>
      %55 = arith.addf %54, %53 : vector<4x16xf32>
      %56 = arith.mulf %55, %25 : vector<4x16xf32>
      %57 = arith.mulf %55, %28 : vector<4x16xf32>
      %c0_36 = arith.constant 0 : index
      %58 = memref.load %arg6[%c0_36] : memref<3xf32, #tpu.memory_space<smem>>
      %59 = vector.broadcast %58 : f32 to vector<4x16xf32>
      %60 = arith.mulf %59, %56 : vector<4x16xf32>
      %61 = arith.addf %30, %60 : vector<4x16xf32>
      %c1 = arith.constant 1 : index
      %c0_37 = arith.constant 0 : index
      %c0_38 = arith.constant 0 : index
      %62 = vector.load %arg3[%c1, %c0_37, %c0_38] : memref<3x16x16xf32, #tpu.memory_space<vmem>>, vector<1x16x16xf32>
      %63 = vector.shape_cast %62 : vector<1x16x16xf32> to vector<16x16xf32>
      %cst_39 = arith.constant dense<0.000000e+00> : vector<4x16xf32>
      %64 = tpu.matmul %29, %63, %cst_39 {dimension_numbers = #tpu.dot_dimension_numbers<[1], [0], [0], [1], [0, 0, 1, 1], [], []>} : vector<4x16xf32>, vector<16x16xf32>, vector<4x16xf32> -> vector<4x16xf32>
      %65 = arith.negf %64 : vector<4x16xf32>
      %66 = math.exp %65 : vector<4x16xf32>
      %cst_40 = arith.constant 1.000000e+00 : f32
      %67 = vector.broadcast %cst_40 : f32 to vector<4x16xf32>
      %68 = arith.addf %67, %66 : vector<4x16xf32>
      %69 = arith.divf %67, %68 : vector<4x16xf32>
      %70 = arith.mulf %69, %56 : vector<4x16xf32>
      %c1_41 = arith.constant 1 : index
      %c0_42 = arith.constant 0 : index
      %c0_43 = arith.constant 0 : index
      %71 = vector.load %arg4[%c1_41, %c0_42, %c0_43] : memref<3x16x16xf32, #tpu.memory_space<vmem>>, vector<1x16x16xf32>
      %72 = vector.shape_cast %71 : vector<1x16x16xf32> to vector<16x16xf32>
      %cst_44 = arith.constant dense<0.000000e+00> : vector<4x16xf32>
      %73 = tpu.matmul %70, %72, %cst_44 {dimension_numbers = #tpu.dot_dimension_numbers<[1], [0], [0], [1], [0, 0, 1, 1], [], []>} : vector<4x16xf32>, vector<16x16xf32>, vector<4x16xf32> -> vector<4x16xf32>
      %74 = arith.mulf %69, %57 : vector<4x16xf32>
      %c1_45 = arith.constant 1 : index
      %c0_46 = arith.constant 0 : index
      %c0_47 = arith.constant 0 : index
      %75 = vector.load %arg5[%c1_45, %c0_46, %c0_47] : memref<3x16x16xf32, #tpu.memory_space<vmem>>, vector<1x16x16xf32>
      %76 = vector.shape_cast %75 : vector<1x16x16xf32> to vector<16x16xf32>
      %cst_48 = arith.constant dense<0.000000e+00> : vector<4x16xf32>
      %77 = tpu.matmul %74, %76, %cst_48 {dimension_numbers = #tpu.dot_dimension_numbers<[1], [0], [0], [1], [0, 0, 1, 1], [], []>} : vector<4x16xf32>, vector<16x16xf32>, vector<4x16xf32> -> vector<4x16xf32>
      %78 = arith.addf %73, %77 : vector<4x16xf32>
      %79 = arith.negf %78 : vector<4x16xf32>
      %80 = math.exp %79 : vector<4x16xf32>
      %cst_49 = arith.constant 1.000000e+00 : f32
      %81 = vector.broadcast %cst_49 : f32 to vector<4x16xf32>
      %82 = arith.addf %81, %80 : vector<4x16xf32>
      %83 = arith.divf %81, %82 : vector<4x16xf32>
      %84 = arith.mulf %69, %83 : vector<4x16xf32>
      %cst_50 = arith.constant 1.000000e+00 : f32
      %85 = vector.broadcast %cst_50 : f32 to vector<4x16xf32>
      %86 = arith.addf %85, %84 : vector<4x16xf32>
      %87 = arith.mulf %86, %56 : vector<4x16xf32>
      %88 = arith.mulf %86, %57 : vector<4x16xf32>
      %c1_51 = arith.constant 1 : index
      %89 = memref.load %arg6[%c1_51] : memref<3xf32, #tpu.memory_space<smem>>
      %90 = vector.broadcast %89 : f32 to vector<4x16xf32>
      %91 = arith.mulf %90, %87 : vector<4x16xf32>
      %92 = arith.addf %61, %91 : vector<4x16xf32>
      %c2 = arith.constant 2 : index
      %c0_52 = arith.constant 0 : index
      %c0_53 = arith.constant 0 : index
      %93 = vector.load %arg3[%c2, %c0_52, %c0_53] : memref<3x16x16xf32, #tpu.memory_space<vmem>>, vector<1x16x16xf32>
      %94 = vector.shape_cast %93 : vector<1x16x16xf32> to vector<16x16xf32>
      %cst_54 = arith.constant dense<0.000000e+00> : vector<4x16xf32>
      %95 = tpu.matmul %29, %94, %cst_54 {dimension_numbers = #tpu.dot_dimension_numbers<[1], [0], [0], [1], [0, 0, 1, 1], [], []>} : vector<4x16xf32>, vector<16x16xf32>, vector<4x16xf32> -> vector<4x16xf32>
      %96 = arith.negf %95 : vector<4x16xf32>
      %97 = math.exp %96 : vector<4x16xf32>
      %cst_55 = arith.constant 1.000000e+00 : f32
      %98 = vector.broadcast %cst_55 : f32 to vector<4x16xf32>
      %99 = arith.addf %98, %97 : vector<4x16xf32>
      %100 = arith.divf %98, %99 : vector<4x16xf32>
      %101 = arith.mulf %100, %87 : vector<4x16xf32>
      %c2_56 = arith.constant 2 : index
      %c0_57 = arith.constant 0 : index
      %c0_58 = arith.constant 0 : index
      %102 = vector.load %arg4[%c2_56, %c0_57, %c0_58] : memref<3x16x16xf32, #tpu.memory_space<vmem>>, vector<1x16x16xf32>
      %103 = vector.shape_cast %102 : vector<1x16x16xf32> to vector<16x16xf32>
      %cst_59 = arith.constant dense<0.000000e+00> : vector<4x16xf32>
      %104 = tpu.matmul %101, %103, %cst_59 {dimension_numbers = #tpu.dot_dimension_numbers<[1], [0], [0], [1], [0, 0, 1, 1], [], []>} : vector<4x16xf32>, vector<16x16xf32>, vector<4x16xf32> -> vector<4x16xf32>
      %105 = arith.mulf %100, %88 : vector<4x16xf32>
      %c2_60 = arith.constant 2 : index
      %c0_61 = arith.constant 0 : index
      %c0_62 = arith.constant 0 : index
      %106 = vector.load %arg5[%c2_60, %c0_61, %c0_62] : memref<3x16x16xf32, #tpu.memory_space<vmem>>, vector<1x16x16xf32>
      %107 = vector.shape_cast %106 : vector<1x16x16xf32> to vector<16x16xf32>
      %cst_63 = arith.constant dense<0.000000e+00> : vector<4x16xf32>
      %108 = tpu.matmul %105, %107, %cst_63 {dimension_numbers = #tpu.dot_dimension_numbers<[1], [0], [0], [1], [0, 0, 1, 1], [], []>} : vector<4x16xf32>, vector<16x16xf32>, vector<4x16xf32> -> vector<4x16xf32>
      %109 = arith.addf %104, %108 : vector<4x16xf32>
      %110 = arith.negf %109 : vector<4x16xf32>
      %111 = math.exp %110 : vector<4x16xf32>
      %cst_64 = arith.constant 1.000000e+00 : f32
      %112 = vector.broadcast %cst_64 : f32 to vector<4x16xf32>
      %113 = arith.addf %112, %111 : vector<4x16xf32>
      %114 = arith.divf %112, %113 : vector<4x16xf32>
      %115 = arith.mulf %100, %114 : vector<4x16xf32>
      %cst_65 = arith.constant 1.000000e+00 : f32
      %116 = vector.broadcast %cst_65 : f32 to vector<4x16xf32>
      %117 = arith.addf %116, %115 : vector<4x16xf32>
      %118 = arith.mulf %117, %87 : vector<4x16xf32>
      %c2_66 = arith.constant 2 : index
      %119 = memref.load %arg6[%c2_66] : memref<3xf32, #tpu.memory_space<smem>>
      %120 = vector.broadcast %119 : f32 to vector<4x16xf32>
      %121 = arith.mulf %120, %118 : vector<4x16xf32>
      %122 = arith.addf %92, %121 : vector<4x16xf32>
      %c0_67 = arith.constant 0 : index
      %c0_68 = arith.constant 0 : index
      %123 = vector.load %arg7[%c0_67, %c0_68] : memref<4x16xf32, #tpu.memory_space<vmem>>, vector<4x16xf32>
      tpu.vector_store %arg7[%c0_67, %c0_68], %122 {strides = array<i32>} : memref<4x16xf32, #tpu.memory_space<vmem>>, vector<4x16xf32>,
    } else {
    }
    return
  }
  func.func @transform_0(%arg0: i32, %arg1: i32) -> (i32, i32, i32) {
    %c0_i32 = arith.constant 0 : i32
    %c0_i32_0 = arith.constant 0 : i32
    return %arg0, %c0_i32, %arg1 : i32, i32, i32
  }
  func.func @transform_1(%arg0: i32, %arg1: i32) -> (i32, i32, i32) {
    %c0_i32 = arith.constant 0 : i32
    %c0_i32_0 = arith.constant 0 : i32
    %c0_i32_1 = arith.constant 0 : i32
    %c0_i32_2 = arith.constant 0 : i32
    return %c0_i32, %c0_i32_0, %c0_i32_1 : i32, i32, i32
  }
  func.func @transform_2(%arg0: i32, %arg1: i32) -> (i32, i32, i32) {
    %c0_i32 = arith.constant 0 : i32
    %c0_i32_0 = arith.constant 0 : i32
    %c0_i32_1 = arith.constant 0 : i32
    %c0_i32_2 = arith.constant 0 : i32
    return %c0_i32, %c0_i32_0, %c0_i32_1 : i32, i32, i32
  }
  func.func @transform_3(%arg0: i32, %arg1: i32) -> (i32, i32, i32) {
    %c0_i32 = arith.constant 0 : i32
    %c0_i32_0 = arith.constant 0 : i32
    %c0_i32_1 = arith.constant 0 : i32
    %c0_i32_2 = arith.constant 0 : i32
    return %c0_i32, %c0_i32_0, %c0_i32_1 : i32, i32, i32
  }
  func.func @transform_4(%arg0: i32, %arg1: i32) -> i32 {
    %c0_i32 = arith.constant 0 : i32
    %c0_i32_0 = arith.constant 0 : i32
    return %c0_i32 : i32
  }
  func.func @transform_5(%arg0: i32, %arg1: i32) -> (i32, i32) {
    %c0_i32 = arith.constant 0 : i32
    %c0_i32_0 = arith.constant 0 : i32
    return %arg0, %c0_i32 : i32, i32
  }
}

</mosaic_0001>

<llo_original>
// kernel: mha_forward.1
$region0: #{mha_forward.1}
  #allocation0 [shape = 'u32[]', space=smem, size = 0x4, offset = 0x4, fixed_abs, tag = 'smem constant byte address 0x4 - core index']
  #allocation1 [shape = 'u32[72,128]{1,0:T(1,128)}', space=vmem, size = 0x9000, scoped, tag = 'internal scratch']
  #allocation2 [shape = 'f32[4,16]{1,0:T(4,128)}', space=vmem, size = 0x800, scoped, tag = 'scratch operand']
  #allocation3 [shape = 'f32[4,16]{1,0:T(4,128)}', space=vmem, size = 0x800, scoped, tag = 'scratch operand']
  %s0 = inlined_call_operand.hbm [shape: f32[4,16,200], index: 0, kind: input, shape index: {}]
  %s1 = inlined_call_operand.hbm [shape: f32[3,16,16], index: 1, kind: input, shape index: {}]
  %s2 = inlined_call_operand.hbm [shape: f32[3,16,16], index: 2, kind: input, shape index: {}]
  %s3 = inlined_call_operand.hbm [shape: f32[3,16,16], index: 3, kind: input, shape index: {}]
  %s4 = inlined_call_operand.vmem [shape: f32[3], index: 4, kind: input, shape index: {}]
  %s5 = inlined_call_operand.hbm [shape: f32[4,16], index: 5, kind: output, shape index: {}]
  %s6 = sld [smem:[#allocation0]]
  $region81: #{mha_forward.1} parent=0
    _
  %s8 = ssub.s32 1, %s6
  %s9 = scalar_select 0, %s8, %s6
  $region1: #{mha_forward.1} parent=0
    #allocation4 [shape = 'u8[65536]{0}', space=vmem, size = 0x10000, scoped, tag = 'input window, operand 0']
    #allocation5 [shape = 's32[2]{0}', space=sflag, size = 0x8, scoped, tag = 'scoped memory for mha_forward.1']
    #allocation6 [shape = 's32[2]{0}', space=sflag, size = 0x8, scoped, tag = 'scoped memory for mha_forward.1']
    #allocation7 [shape = 's32[2]{0}', space=sflag, size = 0x8, scoped, tag = 'scoped memory for mha_forward.1']
    #allocation8 [shape = 'u8[24576]{0}', space=vmem, size = 0x6000, scoped, tag = 'input window, operand 1, single buffered']
    #allocation9 [shape = 's32[1]{0}', space=sflag, size = 0x4, scoped, tag = 'scoped memory for mha_forward.1']
    #allocation10 [shape = 'u8[24576]{0}', space=vmem, size = 0x6000, scoped, tag = 'input window, operand 2, single buffered']
    #allocation11 [shape = 'u8[24576]{0}', space=vmem, size = 0x6000, scoped, tag = 'input window, operand 3, single buffered']
    #allocation12 [shape = 's32[1]{0}', space=sflag, size = 0x4, scoped, tag = 'scoped memory for mha_forward.1']
    #allocation13 [shape = 'u8[512]{0}', space=smem, size = 0x200, scoped, tag = 'input window, operand 4, single buffered']
    #allocation14 [shape = 'u8[2048]{0}', space=vmem, size = 0x800, scoped, tag = 'output window, operand 0, single buffered']
    %10 = vsyncpa [#allocation5], 0
    %s11 = scalar_lea.sflag [#allocation5], 1
    %12 = vsyncpa %s11, 0
    %13 = vsyncpa [#allocation9], 0
    %14 = vsyncpa [#allocation12], 0
    %15 = vsyncpa [#allocation7], 0
    %16 = vsyncpa [#allocation6], 0
    loop: start=0, step=1, limit=4
    $region2: #{mha_forward.1} parent=1 // loop_pre_header
      _
    $region3: #{mha_forward.1} parent=1 // loop_header
      %s18 = sphi 0, %s22
      %p19 = scmp.ge.s32.totalorder %s18, 4
      %s25 = sphi 0, %s37
      %s26 = sphi 0, %s33
      %s27 = sphi 0, %s25
      %s28 = sphi 0, %s26
      %s29 = sphi 0, %s27
      %s30 = sphi 0, %s28
      %s42 = sphi 0, %s44
      %s45 = sphi 0, %s42
      %s46 = sphi 0, %s45
      %s62 = sphi 0, %s46
      %s66 = sphi 0, %s66
      %s68 = sphi 0, %s66
      %s69 = sphi 0, %s68
      %s83 = sphi 0, %s69
      %s87 = sphi 0, %s87
      %s89 = sphi 0, %s87
      %s90 = sphi 0, %s89
      %s104 = sphi 0, %s90
      %s108 = sphi 0, %s108
      %s110 = sphi 0, %s108
      %s111 = sphi 0, %s110
      %s125 = sphi 0, %s111
      %s129 = sphi 0, %s129
      %s131 = sphi 0, %s129
      %s132 = sphi 0, %s131
      %s146 = sphi 0, %s132
      %s152 = sphi 0, %s154
      %s155 = sphi 0, %s152
      %s156 = sphi 0, %s155
      %s172 = sphi 0, %s156
    $region4: #{mha_forward.1} parent=1 // loop_header_branch
      %21 = sbr.rel (%p19) target = $region8
    $region5: #{mha_forward.1} parent=1 // loop_body
      %s23 = ssub.s32 %s18, 1
      %s24 = ssub.s32 %s18, 2
      %s31 = sadd.s32 1, %s26
      %p32 = scmp.ge.s32.totalorder %s31, 2
      %s33 = scalar_select %p32, 0, %s31
      %s34 = sadd.s32 1, %s25
      %s35 = scalar_select %p32, %s34, %s25
      %p36 = scmp.ge.s32.totalorder %s35, 1
      %s37 = scalar_select %p36, 0, %s35
      %s38 = ssub.s32 %s25, %s37
      %s39 = ssub.s32 %s26, %s33
      %s40 = sor.u32 %s38, %s39
      %p41 = scmp.eq.s32.totalorder %s40, 0
      %s43 = sadd.s32 %s42, 1
      %s44 = scalar_select %p41, %s42, %s43
      %p47 = pneg %p41
      %p48 = scmp.eq.s32.totalorder %s18, 1
      %p49 = por %p47, %p48
      %p50 = scmp.ne.s32.totalorder %s42, %s45
      %p51 = scmp.eq.s32.totalorder %s18, 0
      %p52 = por %p50, %p51
      %p53 = scmp.ne.s32.totalorder %s42, %s45
      %p54 = scmp.eq.s32.totalorder %s23, 1
      %p55 = por %p53, %p54
      %p56 = scmp.ne.s32.totalorder %s45, %s46
      %p57 = scmp.eq.s32.totalorder %s23, 0
      %p58 = por %p56, %p57
      %p59 = scmp.ne.s32.totalorder %s45, %s46
      %p60 = scmp.eq.s32.totalorder %s24, 1
      %p61 = por %p59, %p60
      %p63 = scmp.ne.s32.totalorder %s46, %s62
      %p64 = scmp.eq.s32.totalorder %s24, 0
      %p65 = por %p63, %p64
      %s67 = sadd.s32 %s66, 1
      %p70 = scmp.eq.s32.totalorder %s18, 1
      %p71 = scmp.ne.s32.totalorder %s66, %s68
      %p72 = scmp.eq.s32.totalorder %s18, 0
      %p73 = por %p71, %p72
      %p74 = scmp.ne.s32.totalorder %s66, %s68
      %p75 = scmp.eq.s32.totalorder %s23, 1
      %p76 = por %p74, %p75
      %p77 = scmp.ne.s32.totalorder %s68, %s69
      %p78 = scmp.eq.s32.totalorder %s23, 0
      %p79 = por %p77, %p78
      %p80 = scmp.ne.s32.totalorder %s68, %s69
      %p81 = scmp.eq.s32.totalorder %s24, 1
      %p82 = por %p80, %p81
      %p84 = scmp.ne.s32.totalorder %s69, %s83
      %p85 = scmp.eq.s32.totalorder %s24, 0
      %p86 = por %p84, %p85
      %s88 = sadd.s32 %s87, 1
      %p91 = scmp.eq.s32.totalorder %s18, 1
      %p92 = scmp.ne.s32.totalorder %s87, %s89
      %p93 = scmp.eq.s32.totalorder %s18, 0
      %p94 = por %p92, %p93
      %p95 = scmp.ne.s32.totalorder %s87, %s89
      %p96 = scmp.eq.s32.totalorder %s23, 1
      %p97 = por %p95, %p96
      %p98 = scmp.ne.s32.totalorder %s89, %s90
      %p99 = scmp.eq.s32.totalorder %s23, 0
      %p100 = por %p98, %p99
      %p101 = scmp.ne.s32.totalorder %s89, %s90
      %p102 = scmp.eq.s32.totalorder %s24, 1
      %p103 = por %p101, %p102
      %p105 = scmp.ne.s32.totalorder %s90, %s104
      %p106 = scmp.eq.s32.totalorder %s24, 0
      %p107 = por %p105, %p106
      %s109 = sadd.s32 %s108, 1
      %p112 = scmp.eq.s32.totalorder %s18, 1
      %p113 = scmp.ne.s32.totalorder %s108, %s110
      %p114 = scmp.eq.s32.totalorder %s18, 0
      %p115 = por %p113, %p114
      %p116 = scmp.ne.s32.totalorder %s108, %s110
      %p117 = scmp.eq.s32.totalorder %s23, 1
      %p118 = por %p116, %p117
      %p119 = scmp.ne.s32.totalorder %s110, %s111
      %p120 = scmp.eq.s32.totalorder %s23, 0
      %p121 = por %p119, %p120
      %p122 = scmp.ne.s32.totalorder %s110, %s111
      %p123 = scmp.eq.s32.totalorder %s24, 1
      %p124 = por %p122, %p123
      %p126 = scmp.ne.s32.totalorder %s111, %s125
      %p127 = scmp.eq.s32.totalorder %s24, 0
      %p128 = por %p126, %p127
      %s130 = sadd.s32 %s129, 1
      %p133 = scmp.eq.s32.totalorder %s18, 1
      %p134 = scmp.ne.s32.totalorder %s129, %s131
      %p135 = scmp.eq.s32.totalorder %s18, 0
      %p136 = por %p134, %p135
      %p137 = scmp.ne.s32.totalorder %s129, %s131
      %p138 = scmp.eq.s32.totalorder %s23, 1
      %p139 = por %p137, %p138
      %p140 = scmp.ne.s32.totalorder %s131, %s132
      %p141 = scmp.eq.s32.totalorder %s23, 0
      %p142 = por %p140, %p141
      %p143 = scmp.ne.s32.totalorder %s131, %s132
      %p144 = scmp.eq.s32.totalorder %s24, 1
      %p145 = por %p143, %p144
      %p147 = scmp.ne.s32.totalorder %s132, %s146
      %p148 = scmp.eq.s32.totalorder %s24, 0
      %p149 = por %p147, %p148
      %s150 = ssub.s32 %s25, %s37
      %p151 = scmp.eq.s32.totalorder %s150, 0
      %s153 = sadd.s32 %s152, 1
      %s154 = scalar_select %p151, %s152, %s153
      %p157 = pneg %p151
      %p158 = scmp.eq.s32.totalorder %s18, 1
      %p159 = por %p157, %p158
      %p160 = scmp.ne.s32.totalorder %s152, %s155
      %p161 = scmp.eq.s32.totalorder %s18, 0
      %p162 = por %p160, %p161
      %p163 = scmp.ne.s32.totalorder %s152, %s155
      %p164 = scmp.eq.s32.totalorder %s23, 1
      %p165 = por %p163, %p164
      %p166 = scmp.ne.s32.totalorder %s155, %s156
      %p167 = scmp.eq.s32.totalorder %s23, 0
      %p168 = por %p166, %p167
      %p169 = scmp.ne.s32.totalorder %s155, %s156
      %p170 = scmp.eq.s32.totalorder %s24, 1
      %p171 = por %p169, %p170
      %p173 = scmp.ne.s32.totalorder %s156, %s172
      %p174 = scmp.eq.s32.totalorder %s24, 0
      %p175 = por %p173, %p174
      %p176 = scmp.le.s32.totalorder 1, %s18
      %p177 = scmp.lt.s32.totalorder %s18, 3
      %p178 = pnand %p176, %p177
      %p179 = pneg %p178
      // Predicated region
      $region9: #{mha_forward.1} parent=5 // pred_check
        _
      $region10: #{mha_forward.1} parent=5 // pred_check_branch
        %181 = sbr.rel (%p178) target = $region12
      $region11: #{mha_forward.1} parent=5 // pred_region
        %s182 = ssub.s32 %s18, 1
        // Predicated region
        $region13: #{mha_forward.1} parent=11 // pred_check
          %p183 = pneg %p79
        $region14: #{mha_forward.1} parent=11 // pred_check_branch
          %185 = sbr.rel (%p183) target = $region16
        $region15: #{mha_forward.1} parent=11 // pred_region
          %187 = vsyncadd [#allocation9], 0
          %s188 = sshll.u32 %s1, 4
          %s189 = int_to_ptr.hbm [resolvable:$true] %s188
          %s190 = sshll.u32 [#allocation8], 4
          %s191 = int_to_ptr.vmem [resolvable:$true] %s190
          %196 = dma.hbm_to_vmem [thread:$0]  %s189, 768, %s191, [#allocation9], 128, 128, 8
        $region16: #{mha_forward.1} parent=11 // pred_fallthru
          _
        // Predicated region
        $region17: #{mha_forward.1} parent=11 // pred_check
          %p197 = pneg %p100
        $region18: #{mha_forward.1} parent=11 // pred_check_branch
          %199 = sbr.rel (%p197) target = $region20
        $region19: #{mha_forward.1} parent=11 // pred_region
          %201 = vsyncadd [#allocation9], 0
          %s202 = sshll.u32 %s2, 4
          %s203 = int_to_ptr.hbm [resolvable:$true] %s202
          %s204 = sshll.u32 [#allocation10], 4
          %s205 = int_to_ptr.vmem [resolvable:$true] %s204
          %210 = dma.hbm_to_vmem [thread:$0]  %s203, 768, %s205, [#allocation9], 128, 128, 8
        $region20: #{mha_forward.1} parent=11 // pred_fallthru
          _
        // Predicated region
        $region21: #{mha_forward.1} parent=11 // pred_check
          %p211 = pneg %p121
        $region22: #{mha_forward.1} parent=11 // pred_check_branch
          %213 = sbr.rel (%p211) target = $region24
        $region23: #{mha_forward.1} parent=11 // pred_region
          %215 = vsyncadd [#allocation12], 0
          %s216 = sshll.u32 %s3, 4
          %s217 = int_to_ptr.hbm [resolvable:$true] %s216
          %s218 = sshll.u32 [#allocation11], 4
          %s219 = int_to_ptr.vmem [resolvable:$true] %s218
          %224 = dma.hbm_to_vmem [thread:$0]  %s217, 768, %s219, [#allocation12], 128, 128, 8
        $region24: #{mha_forward.1} parent=11 // pred_fallthru
          _
        // Predicated region
        $region25: #{mha_forward.1} parent=11 // pred_check
          %p225 = pneg %p142
        $region26: #{mha_forward.1} parent=11 // pred_check_branch
          %227 = sbr.rel (%p225) target = $region28
        $region27: #{mha_forward.1} parent=11 // pred_region
          %229 = vsyncadd [#allocation7], 0
          %s231 = sshll.u32 %s4, 4
          %s232 = int_to_ptr.vmem [resolvable:$true] %s231
          %234 = dma.vmem_to_smem %s232, 16, [#allocation13], [#allocation7]
        $region28: #{mha_forward.1} parent=11 // pred_fallthru
          _
      $region12: #{mha_forward.1} parent=5 // pred_fallthru
        _
      %p235 = scmp.lt.s32.totalorder %s18, 2
      // Predicated region
      $region29: #{mha_forward.1} parent=5 // pred_check
        %p236 = pneg %p235
      $region30: #{mha_forward.1} parent=5 // pred_check_branch
        %238 = sbr.rel (%p236) target = $region32
      $region31: #{mha_forward.1} parent=5 // pred_region
        // Predicated region
        $region33: #{mha_forward.1} parent=31 // pred_check
          %p239 = pneg %p52
        $region34: #{mha_forward.1} parent=31 // pred_check_branch
          %241 = sbr.rel (%p239) target = $region36
        $region35: #{mha_forward.1} parent=31 // pred_region
          %s242 = sand.u32 %s42, 1
          %s243 = scalar_lea.sflag [#allocation5], %s242
          %s244 = sand.u32 %s42, 1
          %s245 = smul.addr %s244, 64
          %s246 = scalar_lea.vmem [#allocation4], %s245
          %s247 = smul.u32 4, %s25
          %249 = vsyncadd %s243, 0
          %s250 = smul.addr %s247, 4
          %s251 = sadd.s32 %s26, %s250
          %s252 = smul.addr %s251, 8
          %s253 = scalar_lea.hbm %s0, %s252
          %s254 = sshll.u32 %s253, 4
          %s255 = int_to_ptr.hbm [resolvable:$true] %s254
          %s256 = sshll.u32 %s246, 4
          %s257 = int_to_ptr.vmem [resolvable:$true] %s256
          %262 = dma.hbm_to_vmem [thread:$0]  %s255, 1024, %s257, %s243, 256, 128, 8
        $region36: #{mha_forward.1} parent=31 // pred_fallthru
          _
      $region32: #{mha_forward.1} parent=5 // pred_fallthru
        _
      %p263 = scmp.le.s32.totalorder 1, %s18
      %p264 = scmp.lt.s32.totalorder %s18, 3
      %p265 = pnand %p263, %p264
      %p266 = pneg %p265
      // Predicated region
      $region37: #{mha_forward.1} parent=5 // pred_check
        _
      $region38: #{mha_forward.1} parent=5 // pred_check_branch
        %268 = sbr.rel (%p265) target = $region40
      $region39: #{mha_forward.1} parent=5 // pred_region
        %s269 = ssub.s32 %s18, 1
        %s270 = sand.u32 %s45, 1
        %s271 = scalar_lea.sflag [#allocation5], %s270
        %s272 = sand.u32 %s45, 1
        %s273 = smul.addr %s272, 64
        %s274 = scalar_lea.vmem [#allocation4], %s273
        // Predicated region
        $region41: #{mha_forward.1} parent=39 // pred_check
          %p275 = pneg %p58
        $region42: #{mha_forward.1} parent=39 // pred_check_branch
          %277 = sbr.rel (%p275) target = $region44
        $region43: #{mha_forward.1} parent=39 // pred_region
          %279 = dma.done %s271, 1024
        $region44: #{mha_forward.1} parent=39 // pred_fallthru
          _
        // Predicated region
        $region45: #{mha_forward.1} parent=39 // pred_check
          %p280 = pneg %p79
        $region46: #{mha_forward.1} parent=39 // pred_check_branch
          %282 = sbr.rel (%p280) target = $region48
        $region47: #{mha_forward.1} parent=39 // pred_region
          %284 = dma.done [#allocation9], 768
        $region48: #{mha_forward.1} parent=39 // pred_fallthru
          _
        // Predicated region
        $region49: #{mha_forward.1} parent=39 // pred_check
          %p285 = pneg %p100
        $region50: #{mha_forward.1} parent=39 // pred_check_branch
          %287 = sbr.rel (%p285) target = $region52
        $region51: #{mha_forward.1} parent=39 // pred_region
          %289 = dma.done [#allocation9], 768
        $region52: #{mha_forward.1} parent=39 // pred_fallthru
          _
        // Predicated region
        $region53: #{mha_forward.1} parent=39 // pred_check
          %p290 = pneg %p121
        $region54: #{mha_forward.1} parent=39 // pred_check_branch
          %292 = sbr.rel (%p290) target = $region56
        $region55: #{mha_forward.1} parent=39 // pred_region
          %294 = dma.done [#allocation12], 768
        $region56: #{mha_forward.1} parent=39 // pred_fallthru
          _
        // Predicated region
        $region57: #{mha_forward.1} parent=39 // pred_check
          %p295 = pneg %p142
        $region58: #{mha_forward.1} parent=39 // pred_check_branch
          %297 = sbr.rel (%p295) target = $region60
        $region59: #{mha_forward.1} parent=39 // pred_region
          %299 = dma.done [#allocation7], 16
        $region60: #{mha_forward.1} parent=39 // pred_fallthru
          _
        %300 = sfence
        %s301 = sand.u32 %s45, 1
        %s302 = scalar_lea.sflag [#allocation5], %s301
        %s303 = sand.u32 %s45, 1
        %s304 = smul.addr %s303, 64
        %s305 = scalar_lea.vmem [#allocation4], %s304
        %p306 = pneg %p58
        %p307 = pneg %p55
        %p308 = pneg %p79
        %p309 = pneg %p76
        %p310 = pneg %p100
        %p311 = pneg %p97
        %p312 = pneg %p121
        %p313 = pneg %p118
        %p314 = pneg %p142
        %p315 = pneg %p139
        %p316 = pneg %p168
        %p317 = pneg %p165
        %s318 = smul.u32 4, %s27
        %p319 = scmp.eq.s32.totalorder %s28, 0
        // Predicated region
        $region61: #{mha_forward.1} parent=39 // pred_check
          %p320 = pneg %p319
        $region62: #{mha_forward.1} parent=39 // pred_check_branch
          %322 = sbr.rel (%p320) target = $region64
        $region63: #{mha_forward.1} parent=39 // pred_region
          %vm323 = vcmask 125952
          %324 = vst.msk [vmem:[#allocation2] sm:$0xf] %vm323, -inf
          %325 = vst.msk [vmem:[#allocation3] sm:$0xf] %vm323, 0.0
        $region64: #{mha_forward.1} parent=39 // pred_fallthru
          _
        %v326 = vld [vmem:[%s274] sm:$0xff]
        %v327 = vld [vmem:[%s274 + $0x8] sm:$0xff]
        %v328 = vld [vmem:[%s274 + $0x10] sm:$0xff]
        %v329 = vld [vmem:[%s274 + $0x18] sm:$0xff]
        %v330 = vld [vmem:[%s274 + $0x20] sm:$0xff]
        %v331 = vld [vmem:[%s274 + $0x28] sm:$0xff]
        %v332 = vld [vmem:[%s274 + $0x30] sm:$0xff]
        %v333 = vld [vmem:[%s274 + $0x38] sm:$0xff]
        %v334 = vlaneseq
        %v335 = vand.u32 %v334, 127
        %s336 = smul.u32 %s28, 128
        %v337 = vstv %s336
        %v338 = vadd.s32 %v335, %v337
        %vm339 = vcmp.lt.s32.totalorder %v338, 200
        %v340 = vsel %vm339, %v326, -inf
        %v341 = vsel %vm339, %v327, -inf
        %v342 = vsel %vm339, %v328, -inf
        %v343 = vsel %vm339, %v329, -inf
        %v344 = vsel %vm339, %v330, -inf
        %v345 = vsel %vm339, %v331, -inf
        %v346 = vsel %vm339, %v332, -inf
        %v347 = vsel %vm339, %v333, -inf
        %v348 = vsel %vm339, %v326, 0.0
        %v349 = vsel %vm339, %v327, 0.0
        %v350 = vsel %vm339, %v328, 0.0
        %v351 = vsel %vm339, %v329, 0.0
        %v352 = vsel %vm339, %v330, 0.0
        %v353 = vsel %vm339, %v331, 0.0
        %v354 = vsel %vm339, %v332, 0.0
        %v355 = vsel %vm339, %v333, 0.0
        %v356 = vld [vmem:[#allocation2] sm:$0xf]
        %357 = vmax.xlane.f32.xlu0 %v340
        %v358 = vpop.xlane.xlu0 %357
        %359 = vmax.xlane.f32.xlu0 %v341
        %v360 = vpop.xlane.xlu0 %359
        %361 = vmax.xlane.f32.xlu0 %v342
        %v362 = vpop.xlane.xlu0 %361
        %363 = vmax.xlane.f32.xlu0 %v343
        %v364 = vpop.xlane.xlu0 %363
        %365 = vmax.xlane.f32.xlu0 %v344
        %v366 = vpop.xlane.xlu0 %365
        %367 = vmax.xlane.f32.xlu0 %v345
        %v368 = vpop.xlane.xlu0 %367
        %369 = vmax.xlane.f32.xlu0 %v346
        %v370 = vpop.xlane.xlu0 %369
        %371 = vmax.xlane.f32.xlu0 %v347
        %v372 = vpop.xlane.xlu0 %371
        %v381 = vperm.slane %v358, %v335
        %v382 = vadd.s32 %v335, 4294967288
        %v383 = vperm.slane %v360, %v382
        %vm384 = vcmask 130112
        %v385 = vsel %vm384, %v383, %v381
        %v386 = vperm.slane %v362, %v335
        %v387 = vperm.slane %v364, %v382
        %v388 = vsel %vm384, %v387, %v386
        %v389 = vperm.slane %v366, %v335
        %v390 = vperm.slane %v368, %v382
        %v391 = vsel %vm384, %v390, %v389
        %v392 = vperm.slane %v370, %v335
        %v393 = vperm.slane %v372, %v382
        %v394 = vsel %vm384, %v393, %v392
        %vm395 = vcmask 1041409
        %v396 = vsel %vm395, %v388, %v385
        %vm397 = vcmask 1042434
        %v398 = vsel %vm397, %v391, %v396
        %vm399 = vcmask 1043459
        %v400 = vsel %vm399, %v394, %v398
        %v402 = vmax.f32 %v356, %v400
        %vm403 = vcmask 125952
        %404 = vst.msk [vmem:[#allocation2] sm:$0xf] %vm403, %v402
        %v405 = vld [vmem:[#allocation3] sm:$0xf]
        %406 = vadd.xlane.f32.xlu0 %v348
        %v407 = vpop.xlane.xlu0 %406
        %408 = vadd.xlane.f32.xlu0 %v349
        %v409 = vpop.xlane.xlu0 %408
        %410 = vadd.xlane.f32.xlu0 %v350
        %v411 = vpop.xlane.xlu0 %410
        %412 = vadd.xlane.f32.xlu0 %v351
        %v413 = vpop.xlane.xlu0 %412
        %414 = vadd.xlane.f32.xlu0 %v352
        %v415 = vpop.xlane.xlu0 %414
        %416 = vadd.xlane.f32.xlu0 %v353
        %v417 = vpop.xlane.xlu0 %416
        %418 = vadd.xlane.f32.xlu0 %v354
        %v419 = vpop.xlane.xlu0 %418
        %420 = vadd.xlane.f32.xlu0 %v355
        %v421 = vpop.xlane.xlu0 %420
        %v430 = vperm.slane %v407, %v335
        %v431 = vperm.slane %v409, %v382
        %v432 = vsel %vm384, %v431, %v430
        %v433 = vperm.slane %v411, %v335
        %v434 = vperm.slane %v413, %v382
        %v435 = vsel %vm384, %v434, %v433
        %v436 = vperm.slane %v415, %v335
        %v437 = vperm.slane %v417, %v382
        %v438 = vsel %vm384, %v437, %v436
        %v439 = vperm.slane %v419, %v335
        %v440 = vperm.slane %v421, %v382
        %v441 = vsel %vm384, %v440, %v439
        %v442 = vsel %vm395, %v435, %v432
        %v443 = vsel %vm397, %v438, %v442
        %v444 = vsel %vm399, %v441, %v443
        %v446 = vadd.f32 %v405, %v444
        %447 = vst.msk [vmem:[#allocation3] sm:$0xf] %vm403, %v446
        %p448 = scmp.eq.s32.totalorder %s28, 1
        // Predicated region
        $region65: #{mha_forward.1} parent=39 // pred_check
          %p449 = pneg %p448
        $region66: #{mha_forward.1} parent=39 // pred_check_branch
          %451 = sbr.rel (%p449) target = $region68
        $region67: #{mha_forward.1} parent=39 // pred_region
          %v452 = vld [vmem:[#allocation2] sm:$0xf]
          %v453 = vld [vmem:[#allocation3] sm:$0xf]
          %v454 = vmul.f32 %v453, 0.005
          %v455 = vadd.f32 %v452, %v454
          %v456 = vld [vmem:[#allocation8] sm:$0xff]
          %v457 = vld [vmem:[#allocation8 + $0x8] sm:$0xff]
          %vm458 = vcmask 130048
          %v460 = vsel %vm458, %v455, 0
          %462 = vmatpush.msra.mxu0 0.0
          %463 = vmatpush.msra.mxu0 0.0
          %464 = vmatpush.msra.mxu0 0.0
          %465 = vmatpush.msra.mxu0 0.0
          %466 = vmatpush.msra.mxu0 0.0
          %467 = vmatpush.msra.mxu0 0.0
          %468 = vmatpush.msra.mxu0 0.0
          %469 = vmatpush.msra.mxu0 0.0
          %470 = vmatpush.msra.mxu0 0.0
          %471 = vmatpush.msra.mxu0 0.0
          %472 = vmatpush.msra.mxu0 0.0
          %473 = vmatpush.msra.mxu0 0.0
          %474 = vmatpush.msra.mxu0 0.0
          %475 = vmatpush.msra.mxu0 0.0
          %476 = vmatpush.msra.mxu0 %v457
          %477 = vmatpush.msra.mxu0 %v456
          %478 = vmatmul.f32.gmra.mxu0 %v460
          %v479 = vpop.f32.mrf.mxu0
          %v480 = vadd.f32 0.0, %v479
          %481 = vdwg.mxu0
          %v482 = vxor.u32 %v480, 2147483648
          %v483 = vmul.f32 %v482, 1.442695
          %v484 = vpow.pop %v483
          %v485 = vadd.f32 %v484, 1.0
          %v486 = vrcp.pop %v485
          %v487 = vmul.f32 %v485, %v486
          %v488 = vsub.f32 1.0, %v487
          %v489 = vmul.f32 %v486, %v488
          %v490 = vadd.f32 %v486, %v489
          %vm491 = vweird.f32 %v485
          %vm492 = vweird.f32 %v486
          %vm493 = vmor %vm491, %vm492
          %v494 = vsel %vm493, %v486, %v490
          %v495 = vand.u32 2147483647, %v485
          %vm496 = vcmp.eq.f32.partialorder %v495, 8.507059e+37
          %v497 = vand.u32 %v485, 2147483648
          %v498 = vor.u32 1.1754944e-38, %v497
          %v499 = vsel %vm496, %v498, %v494
          %v500 = vmul.f32 1.0, %v499
          %v501 = vmul.f32 %v500, %v452
          %v502 = vld [vmem:[#allocation10] sm:$0xff]
          %v503 = vld [vmem:[#allocation10 + $0x8] sm:$0xff]
          %v504 = vmul.f32 %v500, %v454
          %v505 = vld [vmem:[#allocation11] sm:$0xff]
          %v506 = vld [vmem:[#allocation11 + $0x8] sm:$0xff]
          %v508 = vsel %vm458, %v504, 0
          %510 = vmatpush.msra.mxu0 0.0
          %511 = vmatpush.msra.mxu0 0.0
          %512 = vmatpush.msra.mxu0 0.0
          %513 = vmatpush.msra.mxu0 0.0
          %514 = vmatpush.msra.mxu0 0.0
          %515 = vmatpush.msra.mxu0 0.0
          %516 = vmatpush.msra.mxu0 0.0
          %517 = vmatpush.msra.mxu0 0.0
          %518 = vmatpush.msra.mxu0 0.0
          %519 = vmatpush.msra.mxu0 0.0
          %520 = vmatpush.msra.mxu0 0.0
          %521 = vmatpush.msra.mxu0 0.0
          %522 = vmatpush.msra.mxu0 0.0
          %523 = vmatpush.msra.mxu0 0.0
          %524 = vmatpush.msra.mxu0 %v506
          %525 = vmatpush.msra.mxu0 %v505
          %526 = vmatmul.f32.gmra.mxu0 %v508
          %v527 = vpop.f32.mrf.mxu0
          %v528 = vadd.f32 0.0, %v527
          %529 = vdwg.mxu0
          %v531 = vsel %vm458, %v501, 0
          %533 = vmatpush.msra.mxu0 0.0
          %534 = vmatpush.msra.mxu0 0.0
          %535 = vmatpush.msra.mxu0 0.0
          %536 = vmatpush.msra.mxu0 0.0
          %537 = vmatpush.msra.mxu0 0.0
          %538 = vmatpush.msra.mxu0 0.0
          %539 = vmatpush.msra.mxu0 0.0
          %540 = vmatpush.msra.mxu0 0.0
          %541 = vmatpush.msra.mxu0 0.0
          %542 = vmatpush.msra.mxu0 0.0
          %543 = vmatpush.msra.mxu0 0.0
          %544 = vmatpush.msra.mxu0 0.0
          %545 = vmatpush.msra.mxu0 0.0
          %546 = vmatpush.msra.mxu0 0.0
          %547 = vmatpush.msra.mxu0 %v503
          %548 = vmatpush.msra.mxu0 %v502
          %549 = vmatmul.f32.gmra.mxu0 %v531
          %v550 = vpop.f32.mrf.mxu0
          %v551 = vadd.f32 %v528, %v550
          %552 = vdwg.mxu0
          %v553 = vxor.u32 %v551, 2147483648
          %v554 = vmul.f32 %v553, 1.442695
          %v555 = vpow.pop %v554
          %v556 = vadd.f32 %v555, 1.0
          %v557 = vrcp.pop %v556
          %v558 = vmul.f32 %v556, %v557
          %v559 = vsub.f32 1.0, %v558
          %v560 = vmul.f32 %v557, %v559
          %v561 = vadd.f32 %v557, %v560
          %vm562 = vweird.f32 %v556
          %vm563 = vweird.f32 %v557
          %vm564 = vmor %vm562, %vm563
          %v565 = vsel %vm564, %v557, %v561
          %v566 = vand.u32 2147483647, %v556
          %vm567 = vcmp.eq.f32.partialorder %v566, 8.507059e+37
          %v568 = vand.u32 %v556, 2147483648
          %v569 = vor.u32 1.1754944e-38, %v568
          %v570 = vsel %vm567, %v569, %v565
          %v571 = vmul.f32 1.0, %v570
          %v572 = vmul.f32 %v500, %v571
          %v573 = vadd.f32 %v572, 1.0
          %v574 = vmul.f32 %v573, %v452
          %v575 = vmul.f32 %v573, %v454
          %s576 = sld [smem:[#allocation13]]
          %v577 = vstv %s576
          %v578 = vmul.f32 %v577, %v574
          %v579 = vadd.f32 %v578, 0.0
          %s580 = scalar_lea.vmem [#allocation8], 16
          %v581 = vld [vmem:[%s580] sm:$0xff]
          %v582 = vld [vmem:[%s580 + $0x8] sm:$0xff]
          %583 = vmatpush.msra.mxu0 0.0
          %584 = vmatpush.msra.mxu0 0.0
          %585 = vmatpush.msra.mxu0 0.0
          %586 = vmatpush.msra.mxu0 0.0
          %587 = vmatpush.msra.mxu0 0.0
          %588 = vmatpush.msra.mxu0 0.0
          %589 = vmatpush.msra.mxu0 0.0
          %590 = vmatpush.msra.mxu0 0.0
          %591 = vmatpush.msra.mxu0 0.0
          %592 = vmatpush.msra.mxu0 0.0
          %593 = vmatpush.msra.mxu0 0.0
          %594 = vmatpush.msra.mxu0 0.0
          %595 = vmatpush.msra.mxu0 0.0
          %596 = vmatpush.msra.mxu0 0.0
          %597 = vmatpush.msra.mxu0 %v582
          %598 = vmatpush.msra.mxu0 %v581
          %599 = vmatmul.f32.gmra.mxu0 %v460
          %v600 = vpop.f32.mrf.mxu0
          %v601 = vadd.f32 0.0, %v600
          %602 = vdwg.mxu0
          %v603 = vxor.u32 %v601, 2147483648
          %v604 = vmul.f32 %v603, 1.442695
          %v605 = vpow.pop %v604
          %v606 = vadd.f32 %v605, 1.0
          %v607 = vrcp.pop %v606
          %v608 = vmul.f32 %v606, %v607
          %v609 = vsub.f32 1.0, %v608
          %v610 = vmul.f32 %v607, %v609
          %v611 = vadd.f32 %v607, %v610
          %vm612 = vweird.f32 %v606
          %vm613 = vweird.f32 %v607
          %vm614 = vmor %vm612, %vm613
          %v615 = vsel %vm614, %v607, %v611
          %v616 = vand.u32 2147483647, %v606
          %vm617 = vcmp.eq.f32.partialorder %v616, 8.507059e+37
          %v618 = vand.u32 %v606, 2147483648
          %v619 = vor.u32 1.1754944e-38, %v618
          %v620 = vsel %vm617, %v619, %v615
          %v621 = vmul.f32 1.0, %v620
          %v622 = vmul.f32 %v621, %v574
          %s623 = scalar_lea.vmem [#allocation10], 16
          %v624 = vld [vmem:[%s623] sm:$0xff]
          %v625 = vld [vmem:[%s623 + $0x8] sm:$0xff]
          %v626 = vmul.f32 %v621, %v575
          %s627 = scalar_lea.vmem [#allocation11], 16
          %v628 = vld [vmem:[%s627] sm:$0xff]
          %v629 = vld [vmem:[%s627 + $0x8] sm:$0xff]
          %v631 = vsel %vm458, %v626, 0
          %633 = vmatpush.msra.mxu0 0.0
          %634 = vmatpush.msra.mxu0 0.0
          %635 = vmatpush.msra.mxu0 0.0
          %636 = vmatpush.msra.mxu0 0.0
          %637 = vmatpush.msra.mxu0 0.0
          %638 = vmatpush.msra.mxu0 0.0
          %639 = vmatpush.msra.mxu0 0.0
          %640 = vmatpush.msra.mxu0 0.0
          %641 = vmatpush.msra.mxu0 0.0
          %642 = vmatpush.msra.mxu0 0.0
          %643 = vmatpush.msra.mxu0 0.0
          %644 = vmatpush.msra.mxu0 0.0
          %645 = vmatpush.msra.mxu0 0.0
          %646 = vmatpush.msra.mxu0 0.0
          %647 = vmatpush.msra.mxu0 %v629
          %648 = vmatpush.msra.mxu0 %v628
          %649 = vmatmul.f32.gmra.mxu0 %v631
          %v650 = vpop.f32.mrf.mxu0
          %v651 = vadd.f32 0.0, %v650
          %652 = vdwg.mxu0
          %v654 = vsel %vm458, %v622, 0
          %656 = vmatpush.msra.mxu0 0.0
          %657 = vmatpush.msra.mxu0 0.0
          %658 = vmatpush.msra.mxu0 0.0
          %659 = vmatpush.msra.mxu0 0.0
          %660 = vmatpush.msra.mxu0 0.0
          %661 = vmatpush.msra.mxu0 0.0
          %662 = vmatpush.msra.mxu0 0.0
          %663 = vmatpush.msra.mxu0 0.0
          %664 = vmatpush.msra.mxu0 0.0
          %665 = vmatpush.msra.mxu0 0.0
          %666 = vmatpush.msra.mxu0 0.0
          %667 = vmatpush.msra.mxu0 0.0
          %668 = vmatpush.msra.mxu0 0.0
          %669 = vmatpush.msra.mxu0 0.0
          %670 = vmatpush.msra.mxu0 %v625
          %671 = vmatpush.msra.mxu0 %v624
          %672 = vmatmul.f32.gmra.mxu0 %v654
          %v673 = vpop.f32.mrf.mxu0
          %v674 = vadd.f32 %v651, %v673
          %675 = vdwg.mxu0
          %v676 = vxor.u32 %v674, 2147483648
          %v677 = vmul.f32 %v676, 1.442695
          %v678 = vpow.pop %v677
          %v679 = vadd.f32 %v678, 1.0
          %v680 = vrcp.pop %v679
          %v681 = vmul.f32 %v679, %v680
          %v682 = vsub.f32 1.0, %v681
          %v683 = vmul.f32 %v680, %v682
          %v684 = vadd.f32 %v680, %v683
          %vm685 = vweird.f32 %v679
          %vm686 = vweird.f32 %v680
          %vm687 = vmor %vm685, %vm686
          %v688 = vsel %vm687, %v680, %v684
          %v689 = vand.u32 2147483647, %v679
          %vm690 = vcmp.eq.f32.partialorder %v689, 8.507059e+37
          %v691 = vand.u32 %v679, 2147483648
          %v692 = vor.u32 1.1754944e-38, %v691
          %v693 = vsel %vm690, %v692, %v688
          %v694 = vmul.f32 1.0, %v693
          %v695 = vmul.f32 %v621, %v694
          %v696 = vadd.f32 %v695, 1.0
          %v697 = vmul.f32 %v696, %v574
          %v698 = vmul.f32 %v696, %v575
          %s699 = sld [smem:[#allocation13 + $0x1]]
          %v700 = vstv %s699
          %v701 = vmul.f32 %v700, %v697
          %v702 = vadd.f32 %v579, %v701
          %s703 = scalar_lea.vmem [#allocation8], 32
          %v704 = vld [vmem:[%s703] sm:$0xff]
          %v705 = vld [vmem:[%s703 + $0x8] sm:$0xff]
          %706 = vmatpush.msra.mxu0 0.0
          %707 = vmatpush.msra.mxu0 0.0
          %708 = vmatpush.msra.mxu0 0.0
          %709 = vmatpush.msra.mxu0 0.0
          %710 = vmatpush.msra.mxu0 0.0
          %711 = vmatpush.msra.mxu0 0.0
          %712 = vmatpush.msra.mxu0 0.0
          %713 = vmatpush.msra.mxu0 0.0
          %714 = vmatpush.msra.mxu0 0.0
          %715 = vmatpush.msra.mxu0 0.0
          %716 = vmatpush.msra.mxu0 0.0
          %717 = vmatpush.msra.mxu0 0.0
          %718 = vmatpush.msra.mxu0 0.0
          %719 = vmatpush.msra.mxu0 0.0
          %720 = vmatpush.msra.mxu0 %v705
          %721 = vmatpush.msra.mxu0 %v704
          %722 = vmatmul.f32.gmra.mxu0 %v460
          %v723 = vpop.f32.mrf.mxu0
          %v724 = vadd.f32 0.0, %v723
          %725 = vdwg.mxu0
          %v726 = vxor.u32 %v724, 2147483648
          %v727 = vmul.f32 %v726, 1.442695
          %v728 = vpow.pop %v727
          %v729 = vadd.f32 %v728, 1.0
          %v730 = vrcp.pop %v729
          %v731 = vmul.f32 %v729, %v730
          %v732 = vsub.f32 1.0, %v731
          %v733 = vmul.f32 %v730, %v732
          %v734 = vadd.f32 %v730, %v733
          %vm735 = vweird.f32 %v729
          %vm736 = vweird.f32 %v730
          %vm737 = vmor %vm735, %vm736
          %v738 = vsel %vm737, %v730, %v734
          %v739 = vand.u32 2147483647, %v729
          %vm740 = vcmp.eq.f32.partialorder %v739, 8.507059e+37
          %v741 = vand.u32 %v729, 2147483648
          %v742 = vor.u32 1.1754944e-38, %v741
          %v743 = vsel %vm740, %v742, %v738
          %v744 = vmul.f32 1.0, %v743
          %v745 = vmul.f32 %v744, %v697
          %s746 = scalar_lea.vmem [#allocation10], 32
          %v747 = vld [vmem:[%s746] sm:$0xff]
          %v748 = vld [vmem:[%s746 + $0x8] sm:$0xff]
          %v749 = vmul.f32 %v744, %v698
          %s750 = scalar_lea.vmem [#allocation11], 32
          %v751 = vld [vmem:[%s750] sm:$0xff]
          %v752 = vld [vmem:[%s750 + $0x8] sm:$0xff]
          %v754 = vsel %vm458, %v749, 0
          %756 = vmatpush.msra.mxu0 0.0
          %757 = vmatpush.msra.mxu0 0.0
          %758 = vmatpush.msra.mxu0 0.0
          %759 = vmatpush.msra.mxu0 0.0
          %760 = vmatpush.msra.mxu0 0.0
          %761 = vmatpush.msra.mxu0 0.0
          %762 = vmatpush.msra.mxu0 0.0
          %763 = vmatpush.msra.mxu0 0.0
          %764 = vmatpush.msra.mxu0 0.0
          %765 = vmatpush.msra.mxu0 0.0
          %766 = vmatpush.msra.mxu0 0.0
          %767 = vmatpush.msra.mxu0 0.0
          %768 = vmatpush.msra.mxu0 0.0
          %769 = vmatpush.msra.mxu0 0.0
          %770 = vmatpush.msra.mxu0 %v752
          %771 = vmatpush.msra.mxu0 %v751
          %772 = vmatmul.f32.gmra.mxu0 %v754
          %v773 = vpop.f32.mrf.mxu0
          %v774 = vadd.f32 0.0, %v773
          %775 = vdwg.mxu0
          %v777 = vsel %vm458, %v745, 0
          %779 = vmatpush.msra.mxu0 0.0
          %780 = vmatpush.msra.mxu0 0.0
          %781 = vmatpush.msra.mxu0 0.0
          %782 = vmatpush.msra.mxu0 0.0
          %783 = vmatpush.msra.mxu0 0.0
          %784 = vmatpush.msra.mxu0 0.0
          %785 = vmatpush.msra.mxu0 0.0
          %786 = vmatpush.msra.mxu0 0.0
          %787 = vmatpush.msra.mxu0 0.0
          %788 = vmatpush.msra.mxu0 0.0
          %789 = vmatpush.msra.mxu0 0.0
          %790 = vmatpush.msra.mxu0 0.0
          %791 = vmatpush.msra.mxu0 0.0
          %792 = vmatpush.msra.mxu0 0.0
          %793 = vmatpush.msra.mxu0 %v748
          %794 = vmatpush.msra.mxu0 %v747
          %795 = vmatmul.f32.gmra.mxu0 %v777
          %v796 = vpop.f32.mrf.mxu0
          %v797 = vadd.f32 %v774, %v796
          %798 = vdwg.mxu0
          %v799 = vxor.u32 %v797, 2147483648
          %v800 = vmul.f32 %v799, 1.442695
          %v801 = vpow.pop %v800
          %v802 = vadd.f32 %v801, 1.0
          %v803 = vrcp.pop %v802
          %v804 = vmul.f32 %v802, %v803
          %v805 = vsub.f32 1.0, %v804
          %v806 = vmul.f32 %v803, %v805
          %v807 = vadd.f32 %v803, %v806
          %vm808 = vweird.f32 %v802
          %vm809 = vweird.f32 %v803
          %vm810 = vmor %vm808, %vm809
          %v811 = vsel %vm810, %v803, %v807
          %v812 = vand.u32 2147483647, %v802
          %vm813 = vcmp.eq.f32.partialorder %v812, 8.507059e+37
          %v814 = vand.u32 %v802, 2147483648
          %v815 = vor.u32 1.1754944e-38, %v814
          %v816 = vsel %vm813, %v815, %v811
          %v817 = vmul.f32 1.0, %v816
          %v818 = vmul.f32 %v744, %v817
          %v819 = vadd.f32 %v818, 1.0
          %v820 = vmul.f32 %v819, %v697
          %s821 = sld [smem:[#allocation13 + $0x2]]
          %v822 = vstv %s821
          %v823 = vmul.f32 %v822, %v820
          %v824 = vadd.f32 %v702, %v823
          %825 = vst.msk [vmem:[#allocation14] sm:$0xf] %vm403, %v824
        $region68: #{mha_forward.1} parent=39 // pred_fallthru
          _
        // Predicated region
        $region69: #{mha_forward.1} parent=39 // pred_check
          %p826 = pneg %p165
        $region70: #{mha_forward.1} parent=39 // pred_check_branch
          %828 = sbr.rel (%p826) target = $region72
        $region71: #{mha_forward.1} parent=39 // pred_region
          %830 = vsyncadd [#allocation6], 0
          %s831 = smul.addr %s27, 4
          %s832 = scalar_lea.hbm %s5, %s831
          %s834 = sshll.u32 [#allocation14], 4
          %s835 = int_to_ptr.vmem [resolvable:$true] %s834
          %s836 = sshll.u32 %s832, 4
          %s837 = int_to_ptr.hbm [resolvable:$true] %s836
          %839 = dma.vmem_to_hbm [thread:$0]  %s835, 64, %s837, [#allocation6]
        $region72: #{mha_forward.1} parent=39 // pred_fallthru
          _
        // Predicated region
        $region73: #{mha_forward.1} parent=39 // pred_check
          %p840 = pneg %p165
        $region74: #{mha_forward.1} parent=39 // pred_check_branch
          %842 = sbr.rel (%p840) target = $region76
        $region75: #{mha_forward.1} parent=39 // pred_region
          %844 = dma.done [#allocation6], 64
        $region76: #{mha_forward.1} parent=39 // pred_fallthru
          _
      $region40: #{mha_forward.1} parent=5 // pred_fallthru
        _
      %p845 = scmp.le.s32.totalorder 2, %s18
      // Predicated region
      $region77: #{mha_forward.1} parent=5 // pred_check
        %p846 = pneg %p845
      $region78: #{mha_forward.1} parent=5 // pred_check_branch
        %848 = sbr.rel (%p846) target = $region80
      $region79: #{mha_forward.1} parent=5 // pred_region
        %s849 = ssub.s32 %s18, 2
      $region80: #{mha_forward.1} parent=5 // pred_fallthru
        _
    $region6: #{mha_forward.1} parent=1 // loop_footer
      %s22 = sadd.s32 1, %s18
    $region7: #{mha_forward.1} parent=1 // loop_footer_branch
      %17 = sbr.rel target = $region3
    $region8: #{mha_forward.1} parent=1 // loop_exit
      _
    %850 = vsyncpa [#allocation5], 1
    %s851 = scalar_lea.sflag [#allocation5], 1
    %852 = vsyncpa %s851, 1
    %853 = vsyncpa [#allocation9], 1
    %854 = vsyncpa [#allocation12], 1
    %855 = vsyncpa [#allocation6], 1
    %s856 = scalar_lea.sflag [#allocation6], 1
    %857 = vsyncpa %s856, 1
    %858 = vsyncpa [#allocation7], 1
    %s859 = scalar_lea.sflag [#allocation7], 1
    %860 = vsyncpa %s859, 1

</llo_original>
